<compile_context>
chip_gen: v7x
topology: tpu7x:2x2x1
jax: 0.10.0
libtpu: 0.0.40
codegen_flags: <defaults>
</compile_context>

<pallas_src>
import functools
import math

import jax
import jax.numpy as jnp
from jax.experimental import pallas as pl
from jax.experimental.pallas import tpu as pltpu


# --------------------------------------------------------------------------- kernel
def _ffn_kernel(x_ref, w1_ref, w3_ref, w2_ref, o_ref, acc_ref, *,
                hdim, tile_h, ragged_h):
    """One (row_tile, hidden_tile) step of the fused SwiGLU FFN."""
    h = pl.program_id(1)

    @pl.when(h == 0)
    def _():
        acc_ref[...] = jnp.zeros_like(acc_ref)

    x = x_ref[...]
    # Gate / up projections for this hidden tile (MXU, f32 accumulation).
    h1 = jnp.dot(x, w1_ref[...], preferred_element_type=jnp.float32)
    h3 = jnp.dot(x, w3_ref[...], preferred_element_type=jnp.float32)
    # SiLU gate fully in f32; sigmoid runs on the EUP (free bundle slot).
    g = (h1 * jax.nn.sigmoid(h1)) * h3

    w2 = w2_ref[...]
    if ragged_h:
        # Last hidden tile overhangs hdim: the overhang of the VMEM buffers holds
        # stale data (possibly NaN). Zero BOTH sides of the w2 contraction for the
        # out-of-range hidden indices so 0*0 (never 0*NaN) enters the accumulator.
        base = h * tile_h
        col = base + jax.lax.broadcasted_iota(jnp.int32, (1, tile_h), 1)
        row = base + jax.lax.broadcasted_iota(jnp.int32, (tile_h, 1), 0)
        g = jnp.where(col < hdim, g, 0.0)
        w2 = jnp.where(row < hdim, w2, jnp.zeros_like(w2))

    # Partial down-projection accumulated in f32 VMEM scratch.
    acc_ref[...] += jnp.dot(g.astype(w2.dtype), w2,
                            preferred_element_type=jnp.float32)

    @pl.when(h == pl.num_programs(1) - 1)
    def _():
        o_ref[...] = acc_ref[...].astype(o_ref.dtype)


# ------------------------------------------------------------------- tile selection
def _round_up(x, m):
    return ((x + m - 1) // m) * m


def _sublane(itemsize):
    # Sublane packing: 8 rows for f32, 16 for bf16, 32 for int8/fp8.
    return max(8, 32 // itemsize)


def _tpu_vmem_capacity_bytes():
    default = 128 * 1024 * 1024
    try:
        fn = getattr(pltpu, "get_tpu_info", None)
        if fn is None:
            return default
        cap = getattr(fn(), "vmem_capacity_bytes", None)
        return int(cap) if cap else default
    except Exception:
        return default


def _pick_tile_h(hdim, small_vmem):
    # v7x (64 MiB VMEM/TC): prefer 256 so the double-buffered weight window halves
    # and a large tile_rows still fits. v5e/v6e (128 MiB): 512 first.
    prefs = (256, 512, 128) if small_vmem else (512, 256, 128)
    for cand in prefs:
        if hdim % cand == 0:
            return cand
    if hdim <= 512:
        return hdim            # single full-extent block, never ragged
    return prefs[0]            # ragged tail, masked inside the kernel


def _vmem_bytes(tile_rows, dim, tile_h, x_item, w_item):
    # Double-buffered pipelined operands/outputs + f32 accumulator + f32 temps.
    wts = 2 * (2 * dim * tile_h + tile_h * dim) * w_item     # w1t, w3t, w2t
    x_io = 2 * 2 * tile_rows * dim * x_item                  # x in + out
    acc = tile_rows * dim * 4
    tmp = 3 * tile_rows * tile_h * 4                         # h1, h3, g
    return wts + x_io + acc + tmp


def _pick_tile_rows(rows, dim, tile_h, x_item, w_item, budget):
    sub = _sublane(x_item)
    # Weights are re-streamed from HBM per row tile, so arithmetic intensity per
    # row tile is ~2*tile_rows/itemsize FLOP per weight byte. Bias toward 512/1024
    # (256-aligned for the 256-wide MXU); sub-256 tiles only for tiny row counts.
    cands = [c for c in (1024, 768, 512, 256, 128, 64, 32, 16, 8) if c % sub == 0]
    tile_rows = cands[-1]
    for c in cands:            # biggest sublane-aligned tile that fits the budget
        if _vmem_bytes(c, dim, tile_h, x_item, w_item) <= budget:
            tile_rows = c
            break
    return max(sub, min(tile_rows, _round_up(rows, sub)))


# -------------------------------------------------------------------------- wrapper
def prepare_ffn_weights(w1, w2, w3, compute_dtype=None):
    """One-time conversion of torch-layout Linear weights ((out, in)) to the
    contraction-major layout the kernel consumes. Call once at weight-load time,
    NOT per forward pass (hoists the transposes out of the hot path)."""
    if compute_dtype is not None:
        w1 = w1.astype(compute_dtype)
        w2 = w2.astype(compute_dtype)
        w3 = w3.astype(compute_dtype)
    return w1.T, w3.T, w2.T          # (dim, hdim), (dim, hdim), (hdim, dim)


def feed_forward_pallas(x, w1t, w3t, w2t, *, vmem_budget_bytes=None,
                        vmem_limit_bytes=None):
    """SwiGLU FFN: (silu(x @ w1.T) * (x @ w3.T)) @ w2.T, with pre-transposed weights
    (see prepare_ffn_weights)."""
    orig_shape = x.shape
    dim = int(orig_shape[-1])
    hdim = int(w1t.shape[1])
    assert w1t.shape == (dim, hdim)
    assert w3t.shape == (dim, hdim)
    assert w2t.shape == (hdim, dim)

    rows = 1
    for s in orig_shape[:-1]:
        rows *= int(s)

    x_item = jnp.dtype(x.dtype).itemsize
    w_item = jnp.dtype(w1t.dtype).itemsize

    # Generation-aware VMEM budgeting.
    vmem_cap = _tpu_vmem_capacity_bytes()
    small_vmem = vmem_cap <= 96 * 1024 * 1024       # v7x-class part (64 MiB / TC)
    if vmem_budget_bytes is None:
        vmem_budget_bytes = int(vmem_cap * 0.75)    # 128 MiB -> 96 MiB; 64 -> 48
    if vmem_limit_bytes is None:
        vmem_limit_bytes = int(vmem_cap * 0.84)     # 128 MiB -> ~107 MiB; 64 -> ~53

    tile_h = _pick_tile_h(hdim, small_vmem)
    ragged_h = (hdim % tile_h) != 0
    tile_rows = _pick_tile_rows(rows, dim, tile_h, x_item, w_item, vmem_budget_bytes)

    x2d = x.reshape(rows, dim)      # contiguous view, no copy / no host-side pad

    n_row_tiles = pl.cdiv(rows, tile_rows)
    grid = (n_row_tiles, pl.cdiv(hdim, tile_h))

    # Advisory HBM-traffic estimate including per-row-tile weight re-streaming.
    cost = pl.CostEstimate(
        flops=6 * rows * dim * hdim,
        transcendentals=rows * hdim,
        bytes_accessed=(2 * rows * dim * x_item
                        + n_row_tiles * 3 * dim * hdim * w_item),
    )

    kernel = functools.partial(_ffn_kernel, hdim=hdim, tile_h=tile_h,
                               ragged_h=ragged_h)

    out2d = pl.pallas_call(
        kernel,
        out_shape=jax.ShapeDtypeStruct((rows, dim), x.dtype),
        grid_spec=pltpu.PrefetchScalarGridSpec(
            num_scalar_prefetch=0,
            grid=grid,
            in_specs=[
                pl.BlockSpec((tile_rows, dim), lambda i, h: (i, 0)),
                pl.BlockSpec((dim, tile_h), lambda i, h: (0, h)),
                pl.BlockSpec((dim, tile_h), lambda i, h: (0, h)),
                pl.BlockSpec((tile_h, dim), lambda i, h: (h, 0)),
            ],
            out_specs=pl.BlockSpec((tile_rows, dim), lambda i, h: (i, 0)),
            scratch_shapes=[pltpu.VMEM((tile_rows, dim), jnp.float32)],
        ),
        compiler_params=pltpu.CompilerParams(
            dimension_semantics=("parallel", "arbitrary"),
            vmem_limit_bytes=vmem_limit_bytes,
        ),
        cost_estimate=cost,
    )(x2d, w1t, w3t, w2t)

    return out2d.reshape(orig_shape)


def feed_forward_pallas_torch_layout(x, w1, w2, w3):
    """Drop-in variant taking torch (out, in) weights. For production, call
    prepare_ffn_weights() once and use feed_forward_pallas() directly."""
    w1t, w3t, w2t = prepare_ffn_weights(w1, w2, w3)
    return feed_forward_pallas(x, w1t, w3t, w2t)


# ------------------------------------------------------------------------ reference
def _ffn_hidden_dim(dim, hidden_dim, multiple_of, ffn_dim_multiplier):
    # Mirrors the PyTorch constructor logic.
    hidden_dim = int(2 * hidden_dim / 3)
    if ffn_dim_multiplier is not None:
        hidden_dim = int(ffn_dim_multiplier * hidden_dim)
    return multiple_of * ((hidden_dim + multiple_of - 1) // multiple_of)


def feed_forward_ref(x, w1, w2, w3):
    h1 = x @ w1.T
    h3 = x @ w3.T
    return (jax.nn.silu(h1) * h3) @ w2.T


# ----------------------------------------------------------------------------- main
if __name__ == "__main__":
    key = jax.random.PRNGKey(0)
    kx, k1, k2, k3, kx2, kx3, ka, kb, kc = jax.random.split(key, 9)

    # --- Test 1: module smoke-test shape -------------------------------------
    batch, seq, dim = 2, 8, 32
    hdim = _ffn_hidden_dim(dim, hidden_dim=64, multiple_of=32,
                           ffn_dim_multiplier=None)          # -> 64

    x = jax.random.normal(kx, (batch, seq, dim), dtype=jnp.float32)
    w1 = jax.random.normal(k1, (hdim, dim), dtype=jnp.float32) / math.sqrt(dim)
    w2 = jax.random.normal(k2, (dim, hdim), dtype=jnp.float32) / math.sqrt(hdim)
    w3 = jax.random.normal(k3, (hdim, dim), dtype=jnp.float32) / math.sqrt(dim)

    w1t, w3t, w2t = prepare_ffn_weights(w1, w2, w3)           # once, at load time
    out = jax.block_until_ready(feed_forward_pallas(x, w1t, w3t, w2t))
    ref = feed_forward_ref(x, w1, w2, w3)
    assert out.shape == x.shape
    assert jnp.allclose(out, ref, atol=2e-3, rtol=2e-3), "mismatch vs reference (t1)"

    # --- Test 2: ragged row count (no host-side pad path) --------------------
    x_r = jax.random.normal(kx2, (1, 5, dim), dtype=jnp.float32)
    out_r = jax.block_until_ready(feed_forward_pallas(x_r, w1t, w3t, w2t))
    ref_r = feed_forward_ref(x_r, w1, w2, w3)
    assert jnp.allclose(out_r, ref_r, atol=2e-3, rtol=2e-3), "mismatch (t2 ragged rows)"

    # --- Test 3: ragged hidden dim (in-kernel tail mask) ---------------------
    dim3, hdim3, rows3 = 128, 576, 16          # 576 not divisible by 128
    x3 = jax.random.normal(kx3, (rows3, dim3), dtype=jnp.float32)
    w1_3 = jax.random.normal(ka, (hdim3, dim3), dtype=jnp.float32) / math.sqrt(dim3)
    w2_3 = jax.random.normal(kb, (dim3, hdim3), dtype=jnp.float32) / math.sqrt(hdim3)
    w3_3 = jax.random.normal(kc, (hdim3, dim3), dtype=jnp.float32) / math.sqrt(dim3)
    w1t3, w3t3, w2t3 = prepare_ffn_weights(w1_3, w2_3, w3_3)
    out3 = jax.block_until_ready(feed_forward_pallas(x3, w1t3, w3t3, w2t3))
    ref3 = feed_forward_ref(x3, w1_3, w2_3, w3_3)
    assert jnp.allclose(out3, ref3, atol=2e-3, rtol=2e-3), "mismatch (t3 ragged hidden)"

    print("KERNEL_OK")
</pallas_src>

<mosaic_0001>
module attributes {stable_mosaic.version = 11 : i64} {
  func.func @_ffn_kernel(%arg0: i32, %arg1: i32, %arg2: memref<16x32xf32, #tpu.memory_space<vmem>>, %arg3: memref<32x64xf32, #tpu.memory_space<vmem>>, %arg4: memref<32x64xf32, #tpu.memory_space<vmem>>, %arg5: memref<64x32xf32, #tpu.memory_space<vmem>>, %arg6: memref<16x32xf32, #tpu.memory_space<vmem>>, %arg7: memref<16x32xf32, #tpu.memory_space<vmem>>) attributes {dimension_semantics = [#tpu.dimension_semantics<parallel>, #tpu.dimension_semantics<arbitrary>], iteration_bounds = array<i64: 1, 1>, scalar_prefetch = 0 : i64, scratch_operands = 1 : i64, tpu.core_type = #tpu.core_type<tc>, window_params = [{transform_indices = @transform_0, window_bounds = array<i64: 16, 32>}, {transform_indices = @transform_1, window_bounds = array<i64: 32, 64>}, {transform_indices = @transform_2, window_bounds = array<i64: 32, 64>}, {transform_indices = @transform_3, window_bounds = array<i64: 64, 32>}, {transform_indices = @transform_4, window_bounds = array<i64: 16, 32>}]} {
    %c0_i32 = arith.constant 0 : i32
    %0 = arith.cmpi eq, %arg1, %c0_i32 : i32
    %1 = arith.extui %0 : i1 to i32
    %c0_i32_0 = arith.constant 0 : i32
    %2 = arith.cmpi ne, %1, %c0_i32_0 : i32
    scf.if %2 {
      %cst_17 = arith.constant 0.000000e+00 : f32
      %23 = vector.broadcast %cst_17 : f32 to vector<16x32xf32>
      %c0_18 = arith.constant 0 : index
      %c0_19 = arith.constant 0 : index
      %24 = vector.load %arg7[%c0_18, %c0_19] : memref<16x32xf32, #tpu.memory_space<vmem>>, vector<16x32xf32>
      tpu.vector_store %arg7[%c0_18, %c0_19], %23 {strides = array<i32>} : memref<16x32xf32, #tpu.memory_space<vmem>>, vector<16x32xf32>,
    } else {
    }
    %c0 = arith.constant 0 : index
    %c0_1 = arith.constant 0 : index
    %3 = vector.load %arg2[%c0, %c0_1] : memref<16x32xf32, #tpu.memory_space<vmem>>, vector<16x32xf32>
    %c0_2 = arith.constant 0 : index
    %c0_3 = arith.constant 0 : index
    %4 = vector.load %arg3[%c0_2, %c0_3] : memref<32x64xf32, #tpu.memory_space<vmem>>, vector<32x64xf32>
    %cst = arith.constant dense<0.000000e+00> : vector<16x64xf32>
    %5 = tpu.matmul %3, %4, %cst {dimension_numbers = #tpu.dot_dimension_numbers<[1], [0], [0], [1], [0, 0, 1, 1], [], []>} : vector<16x32xf32>, vector<32x64xf32>, vector<16x64xf32> -> vector<16x64xf32>
    %c0_4 = arith.constant 0 : index
    %c0_5 = arith.constant 0 : index
    %6 = vector.load %arg4[%c0_4, %c0_5] : memref<32x64xf32, #tpu.memory_space<vmem>>, vector<32x64xf32>
    %cst_6 = arith.constant dense<0.000000e+00> : vector<16x64xf32>
    %7 = tpu.matmul %3, %6, %cst_6 {dimension_numbers = #tpu.dot_dimension_numbers<[1], [0], [0], [1], [0, 0, 1, 1], [], []>} : vector<16x32xf32>, vector<32x64xf32>, vector<16x64xf32> -> vector<16x64xf32>
    %8 = arith.negf %5 : vector<16x64xf32>
    %9 = math.exp %8 : vector<16x64xf32>
    %cst_7 = arith.constant 1.000000e+00 : f32
    %10 = vector.broadcast %cst_7 : f32 to vector<16x64xf32>
    %11 = arith.addf %10, %9 : vector<16x64xf32>
    %12 = arith.divf %10, %11 : vector<16x64xf32>
    %13 = arith.mulf %5, %12 : vector<16x64xf32>
    %14 = arith.mulf %13, %7 : vector<16x64xf32>
    %c0_8 = arith.constant 0 : index
    %c0_9 = arith.constant 0 : index
    %15 = vector.load %arg5[%c0_8, %c0_9] : memref<64x32xf32, #tpu.memory_space<vmem>>, vector<64x32xf32>
    %c0_10 = arith.constant 0 : index
    %c0_11 = arith.constant 0 : index
    %16 = vector.load %arg7[%c0_10, %c0_11] : memref<16x32xf32, #tpu.memory_space<vmem>>, vector<16x32xf32>
    %cst_12 = arith.constant dense<0.000000e+00> : vector<16x32xf32>
    %17 = tpu.matmul %14, %15, %cst_12 {dimension_numbers = #tpu.dot_dimension_numbers<[1], [0], [0], [1], [0, 0, 1, 1], [], []>} : vector<16x64xf32>, vector<64x32xf32>, vector<16x32xf32> -> vector<16x32xf32>
    %18 = arith.addf %16, %17 : vector<16x32xf32>
    %c0_13 = arith.constant 0 : index
    %c0_14 = arith.constant 0 : index
    %19 = vector.load %arg7[%c0_13, %c0_14] : memref<16x32xf32, #tpu.memory_space<vmem>>, vector<16x32xf32>
    tpu.vector_store %arg7[%c0_13, %c0_14], %18 {strides = array<i32>} : memref<16x32xf32, #tpu.memory_space<vmem>>, vector<16x32xf32>,
    %c0_i32_15 = arith.constant 0 : i32
    %20 = arith.cmpi eq, %arg1, %c0_i32_15 : i32
    %21 = arith.extui %20 : i1 to i32
    %c0_i32_16 = arith.constant 0 : i32
    %22 = arith.cmpi ne, %21, %c0_i32_16 : i32
    scf.if %22 {
      %c0_17 = arith.constant 0 : index
      %c0_18 = arith.constant 0 : index
      %23 = vector.load %arg7[%c0_17, %c0_18] : memref<16x32xf32, #tpu.memory_space<vmem>>, vector<16x32xf32>
      %c0_19 = arith.constant 0 : index
      %c0_20 = arith.constant 0 : index
      %24 = vector.load %arg6[%c0_19, %c0_20] : memref<16x32xf32, #tpu.memory_space<vmem>>, vector<16x32xf32>
      tpu.vector_store %arg6[%c0_19, %c0_20], %23 {strides = array<i32>} : memref<16x32xf32, #tpu.memory_space<vmem>>, vector<16x32xf32>,
    } else {
    }
    return
  }
  func.func @transform_0(%arg0: i32, %arg1: i32) -> (i32, i32) {
    %c0_i32 = arith.constant 0 : i32
    %c0_i32_0 = arith.constant 0 : i32
    return %arg0, %c0_i32 : i32, i32
  }
  func.func @transform_1(%arg0: i32, %arg1: i32) -> (i32, i32) {
    %c0_i32 = arith.constant 0 : i32
    %c0_i32_0 = arith.constant 0 : i32
    return %c0_i32, %arg1 : i32, i32
  }
  func.func @transform_2(%arg0: i32, %arg1: i32) -> (i32, i32) {
    %c0_i32 = arith.constant 0 : i32
    %c0_i32_0 = arith.constant 0 : i32
    return %c0_i32, %arg1 : i32, i32
  }
  func.func @transform_3(%arg0: i32, %arg1: i32) -> (i32, i32) {
    %c0_i32 = arith.constant 0 : i32
    %c0_i32_0 = arith.constant 0 : i32
    return %arg1, %c0_i32 : i32, i32
  }
  func.func @transform_4(%arg0: i32, %arg1: i32) -> (i32, i32) {
    %c0_i32 = arith.constant 0 : i32
    %c0_i32_0 = arith.constant 0 : i32
    return %arg0, %c0_i32 : i32, i32
  }
}

</mosaic_0001>

<llo_original>
// kernel: tpu_custom_call.1
$region0: #{tpu_custom_call.1}
  #allocation0 [shape = 'u32[]', space=smem, size = 0x4, offset = 0x4, fixed_abs, tag = 'smem constant byte address 0x4 - core index']
  #allocation1 [shape = 'u32[144,128]{1,0:T(1,128)}', space=vmem, size = 0x12000, scoped, tag = 'internal scratch']
  #allocation2 [shape = 'f32[16,32]{1,0:T(8,128)}', space=vmem, size = 0x2000, scoped, tag = 'scratch operand']
  %s0 = inlined_call_operand.hbm [shape: f32[16,32], index: 0, kind: input, shape index: {}]
  %s1 = inlined_call_operand.hbm [shape: f32[32,64], index: 1, kind: input, shape index: {}]
  %s2 = inlined_call_operand.hbm [shape: f32[32,64], index: 2, kind: input, shape index: {}]
  %s3 = inlined_call_operand.hbm [shape: f32[64,32], index: 3, kind: input, shape index: {}]
  %s4 = inlined_call_operand.hbm [shape: f32[16,32], index: 4, kind: output, shape index: {}]
  %s5 = sld [smem:[#allocation0]]
  $region50: #{tpu_custom_call.1} parent=0
    _
  %s7 = ssub.s32 1, %s5
  %s8 = scalar_select 0, %s7, %s5
  $region1: #{tpu_custom_call.1} parent=0
    #allocation3 [shape = 'u8[8192]{0}', space=vmem, size = 0x2000, scoped, tag = 'input window, operand 0, single buffered']
    #allocation4 [shape = 's32[1]{0}', space=sflag, size = 0x4, scoped, tag = 'scoped memory for tpu_custom_call.1']
    #allocation5 [shape = 's32[1]{0}', space=sflag, size = 0x4, scoped, tag = 'scoped memory for tpu_custom_call.1']
    #allocation6 [shape = 'u8[16384]{0}', space=vmem, size = 0x4000, scoped, tag = 'input window, operand 1, single buffered']
    #allocation7 [shape = 's32[1]{0}', space=sflag, size = 0x4, scoped, tag = 'scoped memory for tpu_custom_call.1']
    #allocation8 [shape = 'u8[16384]{0}', space=vmem, size = 0x4000, scoped, tag = 'input window, operand 2, single buffered']
    #allocation9 [shape = 'u8[32768]{0}', space=vmem, size = 0x8000, scoped, tag = 'input window, operand 3, single buffered']
    #allocation10 [shape = 's32[1]{0}', space=sflag, size = 0x4, scoped, tag = 'scoped memory for tpu_custom_call.1']
    #allocation11 [shape = 'u8[8192]{0}', space=vmem, size = 0x2000, scoped, tag = 'output window, operand 0, single buffered']
    %9 = vsyncpa [#allocation4], 0
    %10 = vsyncpa [#allocation7], 0
    %11 = vsyncpa [#allocation10], 0
    %12 = vsyncpa [#allocation5], 0
    // Predicated region
    $region2: #{tpu_custom_call.1} parent=1 // pred_check
      _
    $region3: #{tpu_custom_call.1} parent=1 // pred_check_branch
      %14 = sbr.rel (0) target = $region5
    $region4: #{tpu_custom_call.1} parent=1 // pred_region
      %s16 = ssub.s32 256, 256
      %17 = vsyncadd [#allocation4], %s16
      %s18 = sshll.u32 [#allocation3], 4
      %s19 = int_to_ptr.vmem [resolvable:$true] %s18
      %24 = dma.hbm_to_vmem [thread:$0]  %s0, 256, %s19, [#allocation4], 128, 128, 8
    $region5: #{tpu_custom_call.1} parent=1 // pred_fallthru
      _
    // Predicated region
    $region6: #{tpu_custom_call.1} parent=1 // pred_check
      _
    $region7: #{tpu_custom_call.1} parent=1 // pred_check_branch
      %26 = sbr.rel (0) target = $region9
    $region8: #{tpu_custom_call.1} parent=1 // pred_region
      %s28 = ssub.s32 512, 512
      %29 = vsyncadd [#allocation7], %s28
      %s30 = sshll.u32 [#allocation6], 4
      %s31 = int_to_ptr.vmem [resolvable:$true] %s30
      %36 = dma.hbm_to_vmem [thread:$0]  %s1, 512, %s31, [#allocation7], 128, 128, 8
    $region9: #{tpu_custom_call.1} parent=1 // pred_fallthru
      _
    // Predicated region
    $region10: #{tpu_custom_call.1} parent=1 // pred_check
      _
    $region11: #{tpu_custom_call.1} parent=1 // pred_check_branch
      %38 = sbr.rel (0) target = $region13
    $region12: #{tpu_custom_call.1} parent=1 // pred_region
      %s40 = ssub.s32 512, 512
      %41 = vsyncadd [#allocation7], %s40
      %s42 = sshll.u32 [#allocation8], 4
      %s43 = int_to_ptr.vmem [resolvable:$true] %s42
      %48 = dma.hbm_to_vmem [thread:$0]  %s2, 512, %s43, [#allocation7], 128, 128, 8
    $region13: #{tpu_custom_call.1} parent=1 // pred_fallthru
      _
    // Predicated region
    $region14: #{tpu_custom_call.1} parent=1 // pred_check
      _
    $region15: #{tpu_custom_call.1} parent=1 // pred_check_branch
      %50 = sbr.rel (0) target = $region17
    $region16: #{tpu_custom_call.1} parent=1 // pred_region
      %s52 = ssub.s32 1024, 1024
      %53 = vsyncadd [#allocation10], %s52
      %s54 = sshll.u32 [#allocation9], 4
      %s55 = int_to_ptr.vmem [resolvable:$true] %s54
      %60 = dma.hbm_to_vmem [thread:$0]  %s3, 1024, %s55, [#allocation10], 128, 128, 8
    $region17: #{tpu_custom_call.1} parent=1 // pred_fallthru
      _
    // Predicated region
    $region18: #{tpu_custom_call.1} parent=1 // pred_check
      _
    $region19: #{tpu_custom_call.1} parent=1 // pred_check_branch
      %62 = sbr.rel (0) target = $region21
    $region20: #{tpu_custom_call.1} parent=1 // pred_region
      %63 = dma.done [#allocation4], 256
    $region21: #{tpu_custom_call.1} parent=1 // pred_fallthru
      _
    // Predicated region
    $region22: #{tpu_custom_call.1} parent=1 // pred_check
      _
    $region23: #{tpu_custom_call.1} parent=1 // pred_check_branch
      %65 = sbr.rel (0) target = $region25
    $region24: #{tpu_custom_call.1} parent=1 // pred_region
      %66 = dma.done [#allocation7], 512
    $region25: #{tpu_custom_call.1} parent=1 // pred_fallthru
      _
    // Predicated region
    $region26: #{tpu_custom_call.1} parent=1 // pred_check
      _
    $region27: #{tpu_custom_call.1} parent=1 // pred_check_branch
      %68 = sbr.rel (0) target = $region29
    $region28: #{tpu_custom_call.1} parent=1 // pred_region
      %69 = dma.done [#allocation7], 512
    $region29: #{tpu_custom_call.1} parent=1 // pred_fallthru
      _
    // Predicated region
    $region30: #{tpu_custom_call.1} parent=1 // pred_check
      _
    $region31: #{tpu_custom_call.1} parent=1 // pred_check_branch
      %71 = sbr.rel (0) target = $region33
    $region32: #{tpu_custom_call.1} parent=1 // pred_region
      %72 = dma.done [#allocation10], 1024
    $region33: #{tpu_custom_call.1} parent=1 // pred_fallthru
      _
    %p73 = scmp.eq.s32.totalorder 0, 0
    // Predicated region
    $region34: #{tpu_custom_call.1} parent=1 // pred_check
      %p74 = pneg %p73
    $region35: #{tpu_custom_call.1} parent=1 // pred_check_branch
      %76 = sbr.rel (%p74) target = $region37
    $region36: #{tpu_custom_call.1} parent=1 // pred_region
      %vm77 = vcmask 261120
      %78 = vst.msk [vmem:[#allocation2] sm:$0xff] %vm77, 0.0
      %79 = vst.msk [vmem:[#allocation2 + $0x8] sm:$0xff] %vm77, 0.0
    $region37: #{tpu_custom_call.1} parent=1 // pred_fallthru
      _
    %v80 = vld [vmem:[#allocation3] sm:$0xff]
    %v81 = vld [vmem:[#allocation3 + $0x8] sm:$0xff]
    %v82 = vld [vmem:[#allocation6] sm:$0xff]
    %v83 = vld [vmem:[#allocation6 + $0x8] sm:$0xff]
    %v84 = vld [vmem:[#allocation6 + $0x10] sm:$0xff]
    %v85 = vld [vmem:[#allocation6 + $0x18] sm:$0xff]
    %vm86 = vcmask 261120
    %v88 = vsel %vm86, %v80, 0
    %v91 = vsel %vm86, %v81, 0
    %93 = vmatprep.subr.mxu0 0.0
    %94 = vmatpush1.msra.mxu0 %v82
    %95 = vmatprep.subr.mxu0 0.0
    %96 = vmatpush1.msra.mxu0 %v83
    %97 = vmatprep.subr.mxu0 0.0
    %98 = vmatpush1.msra.mxu0 %v84
    %99 = vmatprep.subr.mxu0 0.0
    %100 = vmatpush1.msra.mxu0 %v85
    %101 = vmatprep.subr.mxu0 0.0
    %102 = vmatpush1.msra.mxu0 0.0
    %103 = vmatprep.subr.mxu0 0.0
    %104 = vmatpush1.msra.mxu0 0.0
    %105 = vmatprep.subr.mxu0 0.0
    %106 = vmatpush1.msra.mxu0 0.0
    %107 = vmatprep.subr.mxu0 0.0
    %108 = vmatpush1.msra.mxu0 0.0
    %109 = vmatprep.subr.mxu0 0.0
    %110 = vmatpush1.msra.mxu0 0.0
    %111 = vmatprep.subr.mxu0 0.0
    %112 = vmatpush1.msra.mxu0 0.0
    %113 = vmatprep.subr.mxu0 0.0
    %114 = vmatpush1.msra.mxu0 0.0
    %115 = vmatprep.subr.mxu0 0.0
    %116 = vmatpush1.msra.mxu0 0.0
    %117 = vmatprep.subr.mxu0 0.0
    %118 = vmatpush1.msra.mxu0 0.0
    %119 = vmatprep.subr.mxu0 0.0
    %120 = vmatpush1.msra.mxu0 0.0
    %121 = vmatprep.subr.mxu0 0.0
    %122 = vmatpush1.msra.mxu0 0.0
    %123 = vmatprep.subr.mxu0 0.0
    %124 = vmatpush1.msra.mxu0 0.0
    %125 = vmatprep.subr.mxu0 0.0
    %126 = vmatpush1.msra.mxu0 0.0
    %127 = vmatprep.subr.mxu0 0.0
    %128 = vmatpush1.msra.mxu0 0.0
    %129 = vmatprep.subr.mxu0 0.0
    %130 = vmatpush1.msra.mxu0 0.0
    %131 = vmatprep.subr.mxu0 0.0
    %132 = vmatpush1.msra.mxu0 0.0
    %133 = vmatprep.subr.mxu0 0.0
    %134 = vmatpush1.msra.mxu0 0.0
    %135 = vmatprep.subr.mxu0 0.0
    %136 = vmatpush1.msra.mxu0 0.0
    %137 = vmatprep.subr.mxu0 0.0
    %138 = vmatpush1.msra.mxu0 0.0
    %139 = vmatprep.subr.mxu0 0.0
    %140 = vmatpush1.msra.mxu0 0.0
    %141 = vmatprep.subr.mxu0 0.0
    %142 = vmatpush1.msra.mxu0 0.0
    %143 = vmatprep.subr.mxu0 0.0
    %144 = vmatpush1.msra.mxu0 0.0
    %145 = vmatprep.subr.mxu0 0.0
    %146 = vmatpush1.msra.mxu0 0.0
    %147 = vmatprep.subr.mxu0 0.0
    %148 = vmatpush1.msra.mxu0 0.0
    %149 = vmatprep.subr.mxu0 0.0
    %150 = vmatpush1.msra.mxu0 0.0
    %151 = vmatprep.subr.mxu0 0.0
    %152 = vmatpush1.msra.mxu0 0.0
    %153 = vmatprep.subr.mxu0 0.0
    %154 = vmatpush1.msra.mxu0 0.0
    %155 = vmatprep.subr.mxu0 0.0
    %156 = vmatpush1.msra.mxu0 0.0
    %157 = vmatprep.mubr.f32.mxu0 0.0
    %158 = vmatmul.mubr.f32.gmra.mrb[0].mxu0 %v88
    %v159 = vpop.f32.mrb[0].mxu0
    %v160 = vadd.f32 0.0, %v159
    %v161 = vpop.f32.mrb[0].mxu0
    %162 = vmatprep.mubr.f32.mxu0 0.0
    %163 = vmatmul.mubr.f32.gmra.mrb[0].mxu0 %v91
    %v164 = vpop.f32.mrb[0].mxu0
    %v165 = vadd.f32 0.0, %v164
    %v166 = vpop.f32.mrb[0].mxu0
    %167 = vdwg.mxu0
    %v168 = vld [vmem:[#allocation8] sm:$0xff]
    %v169 = vld [vmem:[#allocation8 + $0x8] sm:$0xff]
    %v170 = vld [vmem:[#allocation8 + $0x10] sm:$0xff]
    %v171 = vld [vmem:[#allocation8 + $0x18] sm:$0xff]
    %172 = vmatprep.subr.mxu0 0.0
    %173 = vmatpush1.msra.mxu0 %v168
    %174 = vmatprep.subr.mxu0 0.0
    %175 = vmatpush1.msra.mxu0 %v169
    %176 = vmatprep.subr.mxu0 0.0
    %177 = vmatpush1.msra.mxu0 %v170
    %178 = vmatprep.subr.mxu0 0.0
    %179 = vmatpush1.msra.mxu0 %v171
    %180 = vmatprep.subr.mxu0 0.0
    %181 = vmatpush1.msra.mxu0 0.0
    %182 = vmatprep.subr.mxu0 0.0
    %183 = vmatpush1.msra.mxu0 0.0
    %184 = vmatprep.subr.mxu0 0.0
    %185 = vmatpush1.msra.mxu0 0.0
    %186 = vmatprep.subr.mxu0 0.0
    %187 = vmatpush1.msra.mxu0 0.0
    %188 = vmatprep.subr.mxu0 0.0
    %189 = vmatpush1.msra.mxu0 0.0
    %190 = vmatprep.subr.mxu0 0.0
    %191 = vmatpush1.msra.mxu0 0.0
    %192 = vmatprep.subr.mxu0 0.0
    %193 = vmatpush1.msra.mxu0 0.0
    %194 = vmatprep.subr.mxu0 0.0
    %195 = vmatpush1.msra.mxu0 0.0
    %196 = vmatprep.subr.mxu0 0.0
    %197 = vmatpush1.msra.mxu0 0.0
    %198 = vmatprep.subr.mxu0 0.0
    %199 = vmatpush1.msra.mxu0 0.0
    %200 = vmatprep.subr.mxu0 0.0
    %201 = vmatpush1.msra.mxu0 0.0
    %202 = vmatprep.subr.mxu0 0.0
    %203 = vmatpush1.msra.mxu0 0.0
    %204 = vmatprep.subr.mxu0 0.0
    %205 = vmatpush1.msra.mxu0 0.0
    %206 = vmatprep.subr.mxu0 0.0
    %207 = vmatpush1.msra.mxu0 0.0
    %208 = vmatprep.subr.mxu0 0.0
    %209 = vmatpush1.msra.mxu0 0.0
    %210 = vmatprep.subr.mxu0 0.0
    %211 = vmatpush1.msra.mxu0 0.0
    %212 = vmatprep.subr.mxu0 0.0
    %213 = vmatpush1.msra.mxu0 0.0
    %214 = vmatprep.subr.mxu0 0.0
    %215 = vmatpush1.msra.mxu0 0.0
    %216 = vmatprep.subr.mxu0 0.0
    %217 = vmatpush1.msra.mxu0 0.0
    %218 = vmatprep.subr.mxu0 0.0
    %219 = vmatpush1.msra.mxu0 0.0
    %220 = vmatprep.subr.mxu0 0.0
    %221 = vmatpush1.msra.mxu0 0.0
    %222 = vmatprep.subr.mxu0 0.0
    %223 = vmatpush1.msra.mxu0 0.0
    %224 = vmatprep.subr.mxu0 0.0
    %225 = vmatpush1.msra.mxu0 0.0
    %226 = vmatprep.subr.mxu0 0.0
    %227 = vmatpush1.msra.mxu0 0.0
    %228 = vmatprep.subr.mxu0 0.0
    %229 = vmatpush1.msra.mxu0 0.0
    %230 = vmatprep.subr.mxu0 0.0
    %231 = vmatpush1.msra.mxu0 0.0
    %232 = vmatprep.subr.mxu0 0.0
    %233 = vmatpush1.msra.mxu0 0.0
    %234 = vmatprep.subr.mxu0 0.0
    %235 = vmatpush1.msra.mxu0 0.0
    %236 = vmatprep.mubr.f32.mxu0 0.0
    %237 = vmatmul.mubr.f32.gmra.mrb[0].mxu0 %v88
    %v238 = vpop.f32.mrb[0].mxu0
    %v239 = vadd.f32 0.0, %v238
    %v240 = vpop.f32.mrb[0].mxu0
    %241 = vmatprep.mubr.f32.mxu0 0.0
    %242 = vmatmul.mubr.f32.gmra.mrb[0].mxu0 %v91
    %v243 = vpop.f32.mrb[0].mxu0
    %v244 = vadd.f32 0.0, %v243
    %v245 = vpop.f32.mrb[0].mxu0
    %246 = vdwg.mxu0
    %v247 = vxor.u32 %v160, 2147483648
    %v248 = vxor.u32 %v165, 2147483648
    %v249 = vmul.f32 %v247, 1.442695
    %v250 = vpow.pop %v249
    %v251 = vmul.f32 %v248, 1.442695
    %v252 = vpow.pop %v251
    %v253 = vadd.f32 %v250, 1.0
    %v254 = vadd.f32 %v252, 1.0
    %v255 = vrcp.pop %v253
    %v256 = vmul.f32 1.0, %v255
    %v257 = vrcp.pop %v254
    %v258 = vmul.f32 1.0, %v257
    %v259 = vmul.f32 %v160, %v256
    %v260 = vmul.f32 %v165, %v258
    %v261 = vmul.f32 %v259, %v239
    %v262 = vmul.f32 %v260, %v244
    %v263 = vld [vmem:[#allocation9] sm:$0xff]
    %v264 = vld [vmem:[#allocation9 + $0x8] sm:$0xff]
    %v265 = vld [vmem:[#allocation9 + $0x10] sm:$0xff]
    %v266 = vld [vmem:[#allocation9 + $0x18] sm:$0xff]
    %v267 = vld [vmem:[#allocation9 + $0x20] sm:$0xff]
    %v268 = vld [vmem:[#allocation9 + $0x28] sm:$0xff]
    %v269 = vld [vmem:[#allocation9 + $0x30] sm:$0xff]
    %v270 = vld [vmem:[#allocation9 + $0x38] sm:$0xff]
    %v271 = vld [vmem:[#allocation2] sm:$0xff]
    %v272 = vld [vmem:[#allocation2 + $0x8] sm:$0xff]
    %vm273 = vcmask 523264
    %v275 = vsel %vm273, %v261, 0
    %v278 = vsel %vm273, %v262, 0
    %280 = vmatprep.subr.mxu0 0.0
    %281 = vmatpush1.msra.mxu0 %v263
    %282 = vmatprep.subr.mxu0 0.0
    %283 = vmatpush1.msra.mxu0 %v264
    %284 = vmatprep.subr.mxu0 0.0
    %285 = vmatpush1.msra.mxu0 %v265
    %286 = vmatprep.subr.mxu0 0.0
    %287 = vmatpush1.msra.mxu0 %v266
    %288 = vmatprep.subr.mxu0 0.0
    %289 = vmatpush1.msra.mxu0 %v267
    %290 = vmatprep.subr.mxu0 0.0
    %291 = vmatpush1.msra.mxu0 %v268
    %292 = vmatprep.subr.mxu0 0.0
    %293 = vmatpush1.msra.mxu0 %v269
    %294 = vmatprep.subr.mxu0 0.0
    %295 = vmatpush1.msra.mxu0 %v270
    %296 = vmatprep.subr.mxu0 0.0
    %297 = vmatpush1.msra.mxu0 0.0
    %298 = vmatprep.subr.mxu0 0.0
    %299 = vmatpush1.msra.mxu0 0.0
    %300 = vmatprep.subr.mxu0 0.0
    %301 = vmatpush1.msra.mxu0 0.0
    %302 = vmatprep.subr.mxu0 0.0
    %303 = vmatpush1.msra.mxu0 0.0
    %304 = vmatprep.subr.mxu0 0.0
    %305 = vmatpush1.msra.mxu0 0.0
    %306 = vmatprep.subr.mxu0 0.0
    %307 = vmatpush1.msra.mxu0 0.0
    %308 = vmatprep.subr.mxu0 0.0
    %309 = vmatpush1.msra.mxu0 0.0
    %310 = vmatprep.subr.mxu0 0.0
    %311 = vmatpush1.msra.mxu0 0.0
    %312 = vmatprep.subr.mxu0 0.0
    %313 = vmatpush1.msra.mxu0 0.0
    %314 = vmatprep.subr.mxu0 0.0
    %315 = vmatpush1.msra.mxu0 0.0
    %316 = vmatprep.subr.mxu0 0.0
    %317 = vmatpush1.msra.mxu0 0.0
    %318 = vmatprep.subr.mxu0 0.0
    %319 = vmatpush1.msra.mxu0 0.0
    %320 = vmatprep.subr.mxu0 0.0
    %321 = vmatpush1.msra.mxu0 0.0
    %322 = vmatprep.subr.mxu0 0.0
    %323 = vmatpush1.msra.mxu0 0.0
    %324 = vmatprep.subr.mxu0 0.0
    %325 = vmatpush1.msra.mxu0 0.0
    %326 = vmatprep.subr.mxu0 0.0
    %327 = vmatpush1.msra.mxu0 0.0
    %328 = vmatprep.subr.mxu0 0.0
    %329 = vmatpush1.msra.mxu0 0.0
    %330 = vmatprep.subr.mxu0 0.0
    %331 = vmatpush1.msra.mxu0 0.0
    %332 = vmatprep.subr.mxu0 0.0
    %333 = vmatpush1.msra.mxu0 0.0
    %334 = vmatprep.subr.mxu0 0.0
    %335 = vmatpush1.msra.mxu0 0.0
    %336 = vmatprep.subr.mxu0 0.0
    %337 = vmatpush1.msra.mxu0 0.0
    %338 = vmatprep.subr.mxu0 0.0
    %339 = vmatpush1.msra.mxu0 0.0
    %340 = vmatprep.subr.mxu0 0.0
    %341 = vmatpush1.msra.mxu0 0.0
    %342 = vmatprep.subr.mxu0 0.0
    %343 = vmatpush1.msra.mxu0 0.0
    %344 = vmatprep.mubr.f32.mxu0 0.0
    %345 = vmatmul.mubr.f32.gmra.mrb[0].mxu0 %v275
    %v346 = vpop.f32.mrb[0].mxu0
    %v347 = vadd.f32 0.0, %v346
    %v348 = vpop.f32.mrb[0].mxu0
    %349 = vmatprep.mubr.f32.mxu0 0.0
    %350 = vmatmul.mubr.f32.gmra.mrb[0].mxu0 %v278
    %v351 = vpop.f32.mrb[0].mxu0
    %v352 = vadd.f32 0.0, %v351
    %v353 = vpop.f32.mrb[0].mxu0
    %354 = vdwg.mxu0
    %v355 = vadd.f32 %v271, %v347
    %v356 = vadd.f32 %v272, %v352
    %357 = vst.msk [vmem:[#allocation2] sm:$0xff] %vm86, %v355
    %358 = vst.msk [vmem:[#allocation2 + $0x8] sm:$0xff] %vm86, %v356
    // Predicated region
    $region38: #{tpu_custom_call.1} parent=1 // pred_check
      %p359 = pneg %p73
    $region39: #{tpu_custom_call.1} parent=1 // pred_check_branch
      %361 = sbr.rel (%p359) target = $region41
    $region40: #{tpu_custom_call.1} parent=1 // pred_region
      %v362 = vld [vmem:[#allocation2] sm:$0xff]
      %v363 = vld [vmem:[#allocation2 + $0x8] sm:$0xff]
      %364 = vst.msk [vmem:[#allocation11] sm:$0xff] %vm86, %v362
      %365 = vst.msk [vmem:[#allocation11 + $0x8] sm:$0xff] %vm86, %v363
    $region41: #{tpu_custom_call.1} parent=1 // pred_fallthru
      _
    // Predicated region
    $region42: #{tpu_custom_call.1} parent=1 // pred_check
      _
    $region43: #{tpu_custom_call.1} parent=1 // pred_check_branch
      %367 = sbr.rel (0) target = $region45
    $region44: #{tpu_custom_call.1} parent=1 // pred_region
      %s369 = ssub.s32 256, 256
      %370 = vsyncadd [#allocation5], %s369
      %s371 = sshll.u32 [#allocation11], 4
      %s372 = int_to_ptr.vmem [resolvable:$true] %s371
      %377 = dma.vmem_to_hbm [thread:$0]  %s372, 256, %s4, [#allocation5], 128, 128, 8
    $region45: #{tpu_custom_call.1} parent=1 // pred_fallthru
      _
    // Predicated region
    $region46: #{tpu_custom_call.1} parent=1 // pred_check
      _
    $region47: #{tpu_custom_call.1} parent=1 // pred_check_branch
      %379 = sbr.rel (0) target = $region49
    $region48: #{tpu_custom_call.1} parent=1 // pred_region
      %380 = dma.done [#allocation5], 256
    $region49: #{tpu_custom_call.1} parent=1 // pred_fallthru
      _
    %381 = vsyncpa [#allocation4], 1
    %382 = vsyncpa [#allocation7], 1
    %383 = vsyncpa [#allocation10], 1
    %384 = vsyncpa [#allocation5], 1

</llo_original>
